<compile_context>
chip_gen: v7x
topology: tpu7x:2x2x1
jax: 0.10.0
libtpu: 0.0.40
codegen_flags: <defaults>
</compile_context>

<pallas_src>
import jax
import jax.numpy as jnp
import numpy as np
from jax.experimental import pallas as pl
from jax.experimental.pallas import tpu as pltpu


def _round_up(n, m):
    return ((n + m - 1) // m) * m


def _pad_lanes(a, lanes):
    pad = lanes - a.shape[-1]
    return a if pad == 0 else jnp.pad(a, ((0, 0), (0, pad)))


# ---------------------------------------------------------------------------
# Fused kernel builder (specialized on static shape params at trace time).
#
# Packed parameter slab layout (rows x Lpad lanes), Lpad = round_up(T*H, 128):
#   rows [0, F_in)          : W tiled T times along lanes      (F_in, T*H)
#   row  F_in               : bias b tiled T times along lanes (1,    T*H)
#   row  F_in + 1           : TimeEmbedding flattened          (1,    T*H)
#   rows [F_in+2, F_in+2+T) : theta^T in lanes [0, NF)         (T, NF)   [T>1 only]
# ---------------------------------------------------------------------------
def _make_kernel(f_in, t, nf, include_xhat):
    r_theta = f_in + 2

    def _emit_h(h0_ref, p_ref, h_out_ref):
        w_tiled = p_ref[0:f_in, :]                                      # (F_in, Lpad)
        bias = p_ref[f_in:f_in + 1, :] + p_ref[f_in + 1:f_in + 2, :]    # (1, Lpad)
        # One lane-dense MXU matmul producing the full (N, T*H) h slab,
        # followed by a sublane-broadcast add and an unmasked lane-dense store.
        h_out_ref[...] = jnp.dot(h0_ref[...], w_tiled,
                                 preferred_element_type=jnp.float32) + bias

    def _emit_xhat(p_ref, xf_ref, xhat_ref):
        # softmax(theta, dim=1) == softmax over the time axis of theta^T.
        th = p_ref[r_theta:r_theta + t, 0:nf]                            # (T, NF)
        th = th - jnp.max(th, axis=0, keepdims=True)
        e = jnp.exp(th)
        w = e * pl.reciprocal(jnp.sum(e, axis=0, keepdims=True), approx=True)
        xf = xf_ref[...]                                                 # (T, Mpad)
        if nf == 1:
            # num_future == 1: weighted row-sum on the VPU (MXU would waste
            # the array and its drain latency on a 1-row matmul).
            xhat_ref[...] = jnp.sum(w * xf, axis=0, keepdims=True)       # (1, Mpad)
        else:
            xhat_ref[...] = jax.lax.dot_general(
                w, xf, (((0,), (0,)), ((), ())),
                preferred_element_type=jnp.float32,
                precision=jax.lax.Precision.HIGHEST)                     # (NF, Mpad)

    if include_xhat:
        def kernel(h0_ref, p_ref, xf_ref, h_out_ref, xhat_ref):
            _emit_h(h0_ref, p_ref, h_out_ref)
            _emit_xhat(p_ref, xf_ref, xhat_ref)
    else:
        def kernel(h0_ref, p_ref, h_out_ref):
            _emit_h(h0_ref, p_ref, h_out_ref)
    return kernel


# ---------------------------------------------------------------------------
# Wrapper (EGNN_X.forward). Returns (x_hat, h); the PyTorch module returns
# only x_hat — h is returned here for verification of the fused embedding.
# ---------------------------------------------------------------------------
def egnn_x_forward(params, h0, x, edges=None, edge_attr=None):
    T, N, C, D = x.shape
    F_in, H = params['W'].shape
    NF = params['theta'].shape[0]

    L = T * H
    Lpad = _round_up(L, 128)

    vmem = pl.BlockSpec(memory_space=pltpu.MemorySpace.VMEM)

    # --- pack all small parameters into ONE lane-padded slab (single DMA) ---
    w_tiled = _pad_lanes(jnp.tile(params['W'], (1, T)), Lpad)            # (F_in, Lpad)
    b_tiled = _pad_lanes(jnp.tile(params['b'][None, :], (1, T)), Lpad)   # (1, Lpad)
    te_flat = _pad_lanes(params['TE'].reshape(1, L), Lpad)               # (1, Lpad)
    slab_rows = [w_tiled, b_tiled, te_flat]
    if T > 1:
        slab_rows.append(_pad_lanes(params['theta'].T, Lpad))            # (T, Lpad)
    pslab = jnp.concatenate(slab_rows, axis=0)

    if T == 1:
        # Single past frame: module does x_hat = x.squeeze(0); skip the
        # xf/theta DMAs and the whole aggregation block.
        kernel = _make_kernel(F_in, T, NF, include_xhat=False)
        h_slab = pl.pallas_call(
            kernel,
            in_specs=[vmem, vmem],
            out_specs=vmem,
            out_shape=jax.ShapeDtypeStruct((N, Lpad), jnp.float32),
        )(h0, pslab)
        x_hat = x[0]
    else:
        # Flatten x to (T, M) and pad the lane dim to a multiple of 128 so the
        # x_hat store is lane-dense; padding is sliced off below.
        M = N * C * D
        Mpad = _round_up(M, 128)
        xf = _pad_lanes(x.reshape(T, M), Mpad)                           # (T, Mpad)
        kernel = _make_kernel(F_in, T, NF, include_xhat=True)
        h_slab, xhat_pad = pl.pallas_call(
            kernel,
            in_specs=[vmem, vmem, vmem],
            out_specs=(vmem, vmem),
            out_shape=(jax.ShapeDtypeStruct((N, Lpad), jnp.float32),
                       jax.ShapeDtypeStruct((NF, Mpad), jnp.float32)),
        )(h0, pslab, xf)
        x_hat = xhat_pad[:, :M].reshape(NF, N, C, D)
        if NF == 1:
            x_hat = x_hat[0]                                             # .squeeze(0)

    h = jnp.transpose(h_slab[:, :L].reshape(N, T, H), (1, 0, 2))         # (T, N, H)
    return x_hat, h


# ---------------------------------------------------------------------------
# Pure-JAX reference for verification.
# ---------------------------------------------------------------------------
def reference(params, h0, x):
    T, N, C, D = x.shape
    h = jnp.dot(h0, params['W']) + params['b']
    h = h[None] + params['TE'][:, None, :]
    # E_GCL_X layers: identity (not provided).
    if T == 1:
        x_hat = x[0]
    else:
        w = jax.nn.softmax(params['theta'], axis=1)
        x_hat = jnp.einsum('ij,jkts->ikts', w, x,
                           precision=jax.lax.Precision.HIGHEST)
        if x_hat.shape[0] == 1:
            x_hat = jnp.squeeze(x_hat, axis=0)
    return x_hat, h


if __name__ == "__main__":
    key = jax.random.PRNGKey(0)
    num_past, num_future = 8, 1
    batch, n_nodes = 2, 5
    N = batch * n_nodes
    in_node_nf, hidden_nf = 4, 32
    C = 2  # per-node channels of x; x is (num_past, N, C, 3)

    ks = jax.random.split(key, 8)
    h0 = jax.random.normal(ks[0], (N, in_node_nf), jnp.float32)
    x = jax.random.normal(ks[1], (num_past, N, C, 3), jnp.float32)

    params = {
        'W': jax.random.normal(ks[2], (in_node_nf, hidden_nf), jnp.float32) * 0.1,
        'b': jax.random.normal(ks[3], (hidden_nf,), jnp.float32) * 0.1,
        'TE': jax.random.normal(ks[4], (num_past, hidden_nf), jnp.float32) * 0.1,
        # reset_parameters(): theta ~ U(-1, 1)
        'theta': jax.random.uniform(ks[5], (num_future, num_past), jnp.float32,
                                    minval=-1.0, maxval=1.0),
    }

    # edges: fully connected (no self-loops) within each graph; edge_attr random.
    # Consumed only by the E_GCL_X layers (not provided -> unused here).
    rows_l, cols_l = [], []
    for b in range(batch):
        for i in range(n_nodes):
            for j in range(n_nodes):
                if i != j:
                    rows_l.append(b * n_nodes + i)
                    cols_l.append(b * n_nodes + j)
    erows = jnp.asarray(rows_l, jnp.int32)
    ecols = jnp.asarray(cols_l, jnp.int32)
    edge_attr = jax.random.normal(ks[6], (erows.shape[0], 2), jnp.float32)

    x_hat, h = egnn_x_forward(params, h0, x, (erows, ecols), edge_attr)
    jax.block_until_ready((x_hat, h))

    x_hat_r, h_r = reference(params, h0, x)
    assert np.allclose(np.asarray(h), np.asarray(h_r), rtol=1e-3, atol=1e-3)
    assert np.allclose(np.asarray(x_hat), np.asarray(x_hat_r), rtol=1e-3, atol=1e-3)

    print("KERNEL_OK")
</pallas_src>

<mosaic_0001>
module attributes {stable_mosaic.version = 11 : i64} {
  func.func @kernel(%arg0: memref<10x4xf32, #tpu.memory_space<vmem>>, %arg1: memref<14x256xf32, #tpu.memory_space<vmem>>, %arg2: memref<8x128xf32, #tpu.memory_space<vmem>>, %arg3: memref<10x256xf32, #tpu.memory_space<vmem>>, %arg4: memref<1x128xf32, #tpu.memory_space<vmem>>) attributes {dimension_semantics = [], scalar_prefetch = 0 : i64, scratch_operands = 0 : i64, tpu.core_type = #tpu.core_type<tc>} {
    %c0 = arith.constant 0 : index
    %c0_0 = arith.constant 0 : index
    %0 = vector.load %arg1[%c0, %c0_0] : memref<14x256xf32, #tpu.memory_space<vmem>>, vector<4x256xf32>
    %c4 = arith.constant 4 : index
    %c0_1 = arith.constant 0 : index
    %1 = vector.load %arg1[%c4, %c0_1] : memref<14x256xf32, #tpu.memory_space<vmem>>, vector<1x256xf32>
    %c5 = arith.constant 5 : index
    %c0_2 = arith.constant 0 : index
    %2 = vector.load %arg1[%c5, %c0_2] : memref<14x256xf32, #tpu.memory_space<vmem>>, vector<1x256xf32>
    %3 = arith.addf %1, %2 : vector<1x256xf32>
    %c0_3 = arith.constant 0 : index
    %c0_4 = arith.constant 0 : index
    %4 = vector.load %arg0[%c0_3, %c0_4] : memref<10x4xf32, #tpu.memory_space<vmem>>, vector<10x4xf32>
    %cst = arith.constant dense<0.000000e+00> : vector<10x256xf32>
    %5 = tpu.matmul %4, %0, %cst {dimension_numbers = #tpu.dot_dimension_numbers<[1], [0], [0], [1], [0, 0, 1, 1], [], []>} : vector<10x4xf32>, vector<4x256xf32>, vector<10x256xf32> -> vector<10x256xf32>
    %6 = vector.broadcast %3 : vector<1x256xf32> to vector<10x256xf32>
    %7 = arith.addf %5, %6 : vector<10x256xf32>
    %c0_5 = arith.constant 0 : index
    %c0_6 = arith.constant 0 : index
    %8 = vector.load %arg3[%c0_5, %c0_6] : memref<10x256xf32, #tpu.memory_space<vmem>>, vector<10x256xf32>
    tpu.vector_store %arg3[%c0_5, %c0_6], %7 {strides = array<i32>} : memref<10x256xf32, #tpu.memory_space<vmem>>, vector<10x256xf32>,
    %c6 = arith.constant 6 : index
    %c0_7 = arith.constant 0 : index
    %9 = vector.load %arg1[%c6, %c0_7] : memref<14x256xf32, #tpu.memory_space<vmem>>, vector<8x1xf32>
    %cst_8 = arith.constant dense<0xFF800000> : vector<1xf32>
    %10 = vector.multi_reduction <maximumf>, %9, %cst_8 [0] : vector<8x1xf32> to vector<1xf32>
    %11 = vector.shape_cast %10 : vector<1xf32> to vector<1x1xf32>
    %12 = vector.broadcast %11 : vector<1x1xf32> to vector<8x1xf32>
    %13 = arith.subf %9, %12 : vector<8x1xf32>
    %14 = math.exp %13 : vector<8x1xf32>
    %cst_9 = arith.constant dense<0.000000e+00> : vector<1xf32>
    %15 = vector.multi_reduction <add>, %14, %cst_9 [0] : vector<8x1xf32> to vector<1xf32>
    %16 = vector.shape_cast %15 : vector<1xf32> to vector<1x1xf32>
    %17 = tpu.reciprocal %16 {approx = true} : vector<1x1xf32> -> vector<1x1xf32>
    %18 = vector.broadcast %17 : vector<1x1xf32> to vector<8x1xf32>
    %19 = arith.mulf %14, %18 : vector<8x1xf32>
    %c0_10 = arith.constant 0 : index
    %c0_11 = arith.constant 0 : index
    %20 = vector.load %arg2[%c0_10, %c0_11] : memref<8x128xf32, #tpu.memory_space<vmem>>, vector<8x128xf32>
    %21 = vector.broadcast %19 : vector<8x1xf32> to vector<8x128xf32>
    %22 = arith.mulf %21, %20 : vector<8x128xf32>
    %cst_12 = arith.constant dense<0.000000e+00> : vector<128xf32>
    %23 = vector.multi_reduction <add>, %22, %cst_12 [0] : vector<8x128xf32> to vector<128xf32>
    %24 = vector.shape_cast %23 : vector<128xf32> to vector<1x128xf32>
    %c0_13 = arith.constant 0 : index
    %c0_14 = arith.constant 0 : index
    %25 = vector.load %arg4[%c0_13, %c0_14] : memref<1x128xf32, #tpu.memory_space<vmem>>, vector<1x128xf32>
    tpu.vector_store %arg4[%c0_13, %c0_14], %24 {strides = array<i32>} : memref<1x128xf32, #tpu.memory_space<vmem>>, vector<1x128xf32>,
    return
  }
}

</mosaic_0001>

<llo_original>
// kernel: tpu_custom_call.1
$region0: #{tpu_custom_call.1}
  #allocation0 [shape = 'u32[]', space=smem, size = 0x4, offset = 0x4, fixed_abs, tag = 'smem constant byte address 0x4 - core index']
  #allocation1 [shape = 'u32[144,128]{1,0:T(1,128)}', space=vmem, size = 0x12000, scoped, tag = 'internal scratch']
  %s0 = inlined_call_operand.vmem [shape: f32[10,4], index: 0, kind: input, shape index: {}]
  %s1 = inlined_call_operand.hbm [shape: f32[14,256], index: 1, kind: input, shape index: {}]
  %s2 = inlined_call_operand.vmem [shape: f32[8,128], index: 2, kind: input, shape index: {}]
  %s3 = inlined_call_operand.hbm [shape: f32[10,256], index: 3, kind: output, shape index: {0}]
  %s4 = inlined_call_operand.hbm [shape: f32[1,128], index: 4, kind: output, shape index: {1}]
  %5 = xla_tuple %s3, %s4
  %s6 = sld [smem:[#allocation0]]
  $region34: #{tpu_custom_call.1} parent=0
    _
  %s8 = ssub.s32 1, %s6
  %s9 = scalar_select 0, %s8, %s6
  $region1: #{tpu_custom_call.1} parent=0
    #allocation2 [shape = 'u8[16384]{0}', space=vmem, size = 0x4000, scoped, tag = 'input window, operand 1, single buffered']
    #allocation3 [shape = 's32[1]{0}', space=sflag, size = 0x4, scoped, tag = 'scoped memory for tpu_custom_call.1']
    #allocation4 [shape = 's32[1]{0}', space=sflag, size = 0x4, scoped, tag = 'scoped memory for tpu_custom_call.1']
    #allocation5 [shape = 'u8[16384]{0}', space=vmem, size = 0x4000, scoped, tag = 'output window, operand 0, single buffered']
    #allocation6 [shape = 'u8[512]{0}', space=vmem, size = 0x400, scoped, tag = 'output window, operand 1, single buffered']
    #allocation7 [shape = 's32[1]{0}', space=sflag, size = 0x4, scoped, tag = 'scoped memory for tpu_custom_call.1']
    %10 = vsyncpa [#allocation3], 0
    %11 = vsyncpa [#allocation4], 0
    %12 = vsyncpa [#allocation7], 0
    // Predicated region
    $region2: #{tpu_custom_call.1} parent=1 // pred_check
      _
    $region3: #{tpu_custom_call.1} parent=1 // pred_check_branch
      %14 = sbr.rel (0) target = $region5
    $region4: #{tpu_custom_call.1} parent=1 // pred_region
      _
    $region5: #{tpu_custom_call.1} parent=1 // pred_fallthru
      _
    // Predicated region
    $region6: #{tpu_custom_call.1} parent=1 // pred_check
      _
    $region7: #{tpu_custom_call.1} parent=1 // pred_check_branch
      %16 = sbr.rel (0) target = $region9
    $region8: #{tpu_custom_call.1} parent=1 // pred_region
      %s18 = ssub.s32 512, 512
      %19 = vsyncadd [#allocation3], %s18
      %s20 = sshll.u32 [#allocation2], 4
      %s21 = int_to_ptr.vmem [resolvable:$true] %s20
      %26 = dma.hbm_to_vmem [thread:$0]  %s1, 512, %s21, [#allocation3], 256, 256, 16
    $region9: #{tpu_custom_call.1} parent=1 // pred_fallthru
      _
    // Predicated region
    $region10: #{tpu_custom_call.1} parent=1 // pred_check
      _
    $region11: #{tpu_custom_call.1} parent=1 // pred_check_branch
      %28 = sbr.rel (0) target = $region13
    $region12: #{tpu_custom_call.1} parent=1 // pred_region
      _
    $region13: #{tpu_custom_call.1} parent=1 // pred_fallthru
      _
    // Predicated region
    $region14: #{tpu_custom_call.1} parent=1 // pred_check
      _
    $region15: #{tpu_custom_call.1} parent=1 // pred_check_branch
      %30 = sbr.rel (0) target = $region17
    $region16: #{tpu_custom_call.1} parent=1 // pred_region
      %31 = dma.done [#allocation3], 512
    $region17: #{tpu_custom_call.1} parent=1 // pred_fallthru
      _
    %v32 = vld [vmem:[#allocation2] sm:$0xf]
    %v33 = vld [vmem:[#allocation2 + $0x8] sm:$0xf]
    %s34 = scalar_lea.vmem [#allocation2], 4
    %v35 = vld [vmem:[%s34] ss:$8 sm:$0x3]
    %s36 = scalar_lea.vmem [#allocation2], 5
    %v37 = vld [vmem:[%s36] ss:$8 sm:$0x3]
    %v38 = vadd.f32 %v35, %v37
    %v39 = vld [vmem:[%s0] sm:$0xff]
    %v40 = vld [vmem:[%s0 + $0x8] sm:$0x3]
    %v42 = vlaneseq
    %v43 = vshrl.u32 %v42, 7
    %v44 = vsub.s32 0, %v43
    %v45 = vrot.slane %v38, %v44
    %v46 = vlaneseq
    %v47 = vshrl.u32 %v46, 7
    %v48 = vsub.s32 1, %v47
    %v49 = vrot.slane %v38, %v48
    %vm52 = vcmask 31744
    %v54 = vsel %vm52, %v39, 0
    %v57 = vsel %vm52, %v40, 0
    %vm59 = vcmask 1043456
    %v61 = vsel %vm59, %v32, 0
    %v64 = vsel %vm59, %v33, 0
    %66 = vmatprep.subr.mxu0 %v64
    %67 = vmatpush1.msra.mxu0 %v61
    %68 = vmatprep.subr.mxu0 0.0
    %69 = vmatpush1.msra.mxu0 0.0
    %70 = vmatprep.subr.mxu0 0.0
    %71 = vmatpush1.msra.mxu0 0.0
    %72 = vmatprep.subr.mxu0 0.0
    %73 = vmatpush1.msra.mxu0 0.0
    %74 = vmatprep.subr.mxu0 0.0
    %75 = vmatpush1.msra.mxu0 0.0
    %76 = vmatprep.subr.mxu0 0.0
    %77 = vmatpush1.msra.mxu0 0.0
    %78 = vmatprep.subr.mxu0 0.0
    %79 = vmatpush1.msra.mxu0 0.0
    %80 = vmatprep.subr.mxu0 0.0
    %81 = vmatpush1.msra.mxu0 0.0
    %82 = vmatprep.subr.mxu0 0.0
    %83 = vmatpush1.msra.mxu0 0.0
    %84 = vmatprep.subr.mxu0 0.0
    %85 = vmatpush1.msra.mxu0 0.0
    %86 = vmatprep.subr.mxu0 0.0
    %87 = vmatpush1.msra.mxu0 0.0
    %88 = vmatprep.subr.mxu0 0.0
    %89 = vmatpush1.msra.mxu0 0.0
    %90 = vmatprep.subr.mxu0 0.0
    %91 = vmatpush1.msra.mxu0 0.0
    %92 = vmatprep.subr.mxu0 0.0
    %93 = vmatpush1.msra.mxu0 0.0
    %94 = vmatprep.subr.mxu0 0.0
    %95 = vmatpush1.msra.mxu0 0.0
    %96 = vmatprep.subr.mxu0 0.0
    %97 = vmatpush1.msra.mxu0 0.0
    %98 = vmatprep.subr.mxu0 0.0
    %99 = vmatpush1.msra.mxu0 0.0
    %100 = vmatprep.subr.mxu0 0.0
    %101 = vmatpush1.msra.mxu0 0.0
    %102 = vmatprep.subr.mxu0 0.0
    %103 = vmatpush1.msra.mxu0 0.0
    %104 = vmatprep.subr.mxu0 0.0
    %105 = vmatpush1.msra.mxu0 0.0
    %106 = vmatprep.subr.mxu0 0.0
    %107 = vmatpush1.msra.mxu0 0.0
    %108 = vmatprep.subr.mxu0 0.0
    %109 = vmatpush1.msra.mxu0 0.0
    %110 = vmatprep.subr.mxu0 0.0
    %111 = vmatpush1.msra.mxu0 0.0
    %112 = vmatprep.subr.mxu0 0.0
    %113 = vmatpush1.msra.mxu0 0.0
    %114 = vmatprep.subr.mxu0 0.0
    %115 = vmatpush1.msra.mxu0 0.0
    %116 = vmatprep.subr.mxu0 0.0
    %117 = vmatpush1.msra.mxu0 0.0
    %118 = vmatprep.subr.mxu0 0.0
    %119 = vmatpush1.msra.mxu0 0.0
    %120 = vmatprep.subr.mxu0 0.0
    %121 = vmatpush1.msra.mxu0 0.0
    %122 = vmatprep.subr.mxu0 0.0
    %123 = vmatpush1.msra.mxu0 0.0
    %124 = vmatprep.subr.mxu0 0.0
    %125 = vmatpush1.msra.mxu0 0.0
    %126 = vmatprep.subr.mxu0 0.0
    %127 = vmatpush1.msra.mxu0 0.0
    %128 = vmatprep.subr.mxu0 0.0
    %129 = vmatpush1.msra.mxu0 0.0
    %130 = vmatprep.mubr.f32.mxu0 0.0
    %131 = vmatmul.mubr.f32.gmra.mrb[0].mxu0 %v54
    %v132 = vpop.f32.mrb[0].mxu0
    %v133 = vadd.f32 %v45, %v132
    %v134 = vpop.f32.mrb[0].mxu0
    %v135 = vadd.f32 %v49, %v134
    %136 = vmatprep.mubr.f32.mxu0 0.0
    %137 = vmatmul.mubr.f32.gmra.mrb[0].mxu0 %v57
    %v138 = vpop.f32.mrb[0].mxu0
    %v139 = vadd.f32 %v45, %v138
    %v140 = vpop.f32.mrb[0].mxu0
    %v141 = vadd.f32 %v49, %v140
    %142 = vdwg.mxu0
    %143 = vst [vmem:[#allocation5] sm:$0xff] %v133
    %144 = vst [vmem:[#allocation5 + $0x8] sm:$0xff] %v135
    %145 = vst [vmem:[#allocation5 + $0x10] sm:$0x3] %v139
    %146 = vst [vmem:[#allocation5 + $0x18] sm:$0x3] %v141
    %v147 = vld [vmem:[#allocation2] sm:$0xc0]
    %v148 = vld [vmem:[#allocation2 + $0x10] sm:$0x3f]
    %vm149 = vcmask 7174
    %v150 = vsel %vm149, %v147, -inf
    %vm151 = vcmask 5120
    %v152 = vsel %vm151, %v148, -inf
    %v153 = vmax.f32 %v150, %v152
    %v154 = vrot.slane %v153, 4
    %v155 = vmax.f32 %v153, %v154
    %v156 = vrot.slane %v155, 2
    %v157 = vmax.f32 %v155, %v156
    %v158 = vrot.slane %v157, 1
    %v159 = vmax.f32 %v157, %v158
    %v160 = vsub.f32 %v147, %v159
    %v161 = vsub.f32 %v148, %v159
    %v162 = vmul.f32 %v160, 1.442695
    %v163 = vpow.pop %v162
    %v164 = vmul.f32 %v161, 1.442695
    %v165 = vpow.pop %v164
    %vm168 = vcmask 1041408
    %v169 = vrot.slane %v163, 6
    %v170 = vrot.slane %v165, 6
    %v171 = vsel %vm168, %v169, %v170
    %vm173 = vcmask 7168
    %v174 = vsel %vm173, %v171, 0.0
    %v175 = vrot.slane %v174, 4
    %v176 = vadd.f32 %v174, %v175
    %v177 = vrot.slane %v176, 2
    %v178 = vadd.f32 %v176, %v177
    %v179 = vrot.slane %v178, 1
    %v180 = vadd.f32 %v178, %v179
    %v181 = vrcp.pop %v180
    %v182 = vmul.f32 %v163, %v181
    %v183 = vmul.f32 %v165, %v181
    %v184 = vld [vmem:[%s2] sm:$0xff]
    %186 = vset.pattern.permute.xlu0 0
    %187 = vperm.xlu0 %186, %v182
    %v188 = vpop.permute.xlu0 %187
    %191 = vset.pattern.permute.xlu0 0
    %192 = vperm.xlu0 %191, %v183
    %v193 = vpop.permute.xlu0 %192
    %v196 = vrot.slane %v184, 2
    %v198 = vmul.f32 %v188, %v196
    %v199 = vmul.f32 %v193, %v196
    %v202 = vrot.slane %v198, 6
    %v203 = vrot.slane %v199, 6
    %v204 = vsel %vm168, %v202, %v203
    %v206 = vrot.slane %v204, 4
    %v207 = vadd.f32 %v204, %v206
    %v208 = vrot.slane %v207, 2
    %v209 = vadd.f32 %v207, %v208
    %v210 = vrot.slane %v209, 1
    %v211 = vadd.f32 %v209, %v210
    %212 = vst [vmem:[#allocation6] sm:$0x1] %v211
    // Predicated region
    $region18: #{tpu_custom_call.1} parent=1 // pred_check
      _
    $region19: #{tpu_custom_call.1} parent=1 // pred_check_branch
      %214 = sbr.rel (0) target = $region21
    $region20: #{tpu_custom_call.1} parent=1 // pred_region
      %s216 = ssub.s32 512, 512
      %217 = vsyncadd [#allocation4], %s216
      %s218 = sshll.u32 [#allocation5], 4
      %s219 = int_to_ptr.vmem [resolvable:$true] %s218
      %224 = dma.vmem_to_hbm [thread:$0]  %s219, 512, %s3, [#allocation4], 256, 256, 16
    $region21: #{tpu_custom_call.1} parent=1 // pred_fallthru
      _
    // Predicated region
    $region22: #{tpu_custom_call.1} parent=1 // pred_check
      _
    $region23: #{tpu_custom_call.1} parent=1 // pred_check_branch
      %226 = sbr.rel (0) target = $region25
    $region24: #{tpu_custom_call.1} parent=1 // pred_region
      %s228 = ssub.s32 16, 16
      %229 = vsyncadd [#allocation7], %s228
      %s231 = sshll.u32 [#allocation6], 4
      %s232 = int_to_ptr.vmem [resolvable:$true] %s231
      %234 = dma.vmem_to_hbm [thread:$0]  %s232, 16, %s4, [#allocation7]
    $region25: #{tpu_custom_call.1} parent=1 // pred_fallthru
      _
    // Predicated region
    $region26: #{tpu_custom_call.1} parent=1 // pred_check
      _
    $region27: #{tpu_custom_call.1} parent=1 // pred_check_branch
      %236 = sbr.rel (0) target = $region29
    $region28: #{tpu_custom_call.1} parent=1 // pred_region
      %237 = dma.done [#allocation4], 512
    $region29: #{tpu_custom_call.1} parent=1 // pred_fallthru
      _
    // Predicated region
    $region30: #{tpu_custom_call.1} parent=1 // pred_check
      _
    $region31: #{tpu_custom_call.1} parent=1 // pred_check_branch
      %239 = sbr.rel (0) target = $region33
    $region32: #{tpu_custom_call.1} parent=1 // pred_region
      %240 = dma.done [#allocation7], 16
    $region33: #{tpu_custom_call.1} parent=1 // pred_fallthru
      _
    %241 = vsyncpa [#allocation3], 1
    %242 = vsyncpa [#allocation4], 1
    %243 = vsyncpa [#allocation7], 1

</llo_original>
